<compile_context>
chip_gen: v7x
topology: tpu7x:2x2x1
jax: 0.10.0
libtpu: 0.0.40
codegen_flags: <defaults>
</compile_context>

<pallas_src>
import functools

import jax
import jax.numpy as jnp
from jax.experimental import pallas as pl
from jax.experimental.pallas import tpu as pltpu

_BN_EPS = 1e-5
_LANE = 128
_MIB = 1024 * 1024


# --------------------------------------------------------------------------- #
# Kernel body: 3 MXU matmuls (bf16 operands, f32 accumulate) + bias + ReLU.   #
# Eval-mode BN is already folded into W1/b1 and W2/b2; Dropout is identity.   #
# --------------------------------------------------------------------------- #
def _linblock_kernel(x_ref, w1_ref, b1_ref, w2_ref, b2_ref, w3_ref, b3_ref,
                     out_ref):
    h = jnp.dot(x_ref[...], w1_ref[...],
                preferred_element_type=jnp.float32) + b1_ref[...]
    h = jnp.maximum(h, 0.0).astype(w2_ref.dtype)

    h = jnp.dot(h, w2_ref[...],
                preferred_element_type=jnp.float32) + b2_ref[...]
    h = jnp.maximum(h, 0.0).astype(w3_ref.dtype)

    out_ref[...] = (jnp.dot(h, w3_ref[...],
                            preferred_element_type=jnp.float32)
                    + b3_ref[...]).astype(out_ref.dtype)


# --------------------------------------------------------------------------- #
# One-time parameter preparation (eval-mode params are fixed).                #
# --------------------------------------------------------------------------- #
def _fold_bn(w, b, gamma, beta, mean, var, eps=_BN_EPS):
    """Fold eval-mode BatchNorm1d affine into the preceding Linear."""
    scale = gamma * jax.lax.rsqrt(var + eps)        # (1, out)
    return w * scale, (b - mean) * scale + beta


def _round_up(x, m):
    return ((x + m - 1) // m) * m


def _pad2(a, rows, cols):
    r, c = a.shape
    return jnp.pad(a, ((0, rows - r), (0, cols - c)))


def prepare_linblock_params(params, *, compute_dtype=jnp.bfloat16):
    """Fold BN running stats into the preceding Linears, zero-pad feature dims
    to multiples of 128 (lane-dense stores, no leakage: padded rows/cols and
    biases are exactly zero) and cast weight matrices to the MXU compute
    dtype.  Biases stay float32.  Call once; reuse across forwards."""
    in_size, l0 = params["w1"].shape
    l1 = params["w2"].shape[1]
    out_size = params["w3"].shape[1]

    w1, b1 = _fold_bn(params["w1"], params["b1"], params["g1"],
                      params["be1"], params["m1"], params["v1"])
    w2, b2 = _fold_bn(params["w2"], params["b2"], params["g2"],
                      params["be2"], params["m2"], params["v2"])
    w3, b3 = params["w3"], params["b3"]

    l0p = _round_up(l0, _LANE)
    l1p = _round_up(l1, _LANE)
    outp = _round_up(out_size, _LANE)

    return dict(
        w1=_pad2(w1, in_size, l0p).astype(compute_dtype),
        b1=_pad2(b1, 1, l0p).astype(jnp.float32),
        w2=_pad2(w2, l0p, l1p).astype(compute_dtype),
        b2=_pad2(b2, 1, l1p).astype(jnp.float32),
        w3=_pad2(w3, l1p, outp).astype(compute_dtype),
        b3=_pad2(b3, 1, outp).astype(jnp.float32),
        out_size=out_size,
    )


# --------------------------------------------------------------------------- #
# Generation-aware tiling plan.                                               #
# --------------------------------------------------------------------------- #
def _plan_tiling(n, in_size, l0p, l1p, outp, weight_bytes, bias_bytes):
    """Pick (batch_tile, padded_batch, vmem_limit_bytes) from VMEM capacity."""
    try:
        vmem_cap = int(pltpu.get_tpu_info().vmem_capacity_bytes)
    except Exception:
        vmem_cap = 64 * _MIB            # conservative (v7x per-core) fallback
    vmem_limit = min(vmem_cap * 7 // 8, 100 * _MIB)   # ~56 MiB v7x, 100 MiB v5e/v6e

    # Bytes that scale with the batch tile: bf16 x (double-buffered), f32 out
    # (double-buffered), f32 hidden activations + bf16 re-cast copies.
    per_row = 2 * in_size * 2 + 2 * outp * 4 + 6 * (l0p + l1p)
    # Resident weights/biases; counted twice in case the single-buffer path
    # falls back to default double-buffering.
    resident = 2 * (weight_bytes + bias_bytes)
    budget = vmem_limit - resident - 4 * _MIB          # headroom
    tn_cap = max(budget // max(per_row, 1), 16)

    if n <= 256 and n <= tn_cap:
        return n, n, vmem_limit          # single full-batch tile, no padding

    # Multi-step grid: cap by VMEM budget / 2048, force >= 2 steps so both
    # v7x TensorCores get work; keep tiles multiples of 16 (bf16 sublane pack)
    # and pad the batch so every tile is full (no masked stores).
    tn = min(2048, int(tn_cap), _round_up(pl.cdiv(n, 2), 16))
    tn = max(16, (tn // 16) * 16)
    n_pad = _round_up(n, tn)
    return tn, n_pad, vmem_limit


# --------------------------------------------------------------------------- #
# Forward.                                                                    #
# --------------------------------------------------------------------------- #
@functools.partial(
    jax.jit,
    static_argnames=("tn", "n_pad", "out_size", "single_buffer", "vmem_limit"))
def _forward_impl(x, w1, b1, w2, b2, w3, b3, *, tn, n_pad, out_size,
                  single_buffer, vmem_limit):
    n, in_size = x.shape
    l0p = w1.shape[1]
    l1p = w2.shape[1]
    outp = w3.shape[1]

    xc = x.astype(w1.dtype)
    if n_pad > n:                        # pad so every batch tile is full
        xc = jnp.pad(xc, ((0, n_pad - n), (0, 0)))

    def resident(shape):
        # Block index never changes across the grid -> a single VMEM copy is
        # enough; double-buffering these would only waste VMEM.
        if single_buffer:
            return pl.BlockSpec(shape, lambda i: (0, 0),
                                pipeline_mode=pl.Buffered(1))
        return pl.BlockSpec(shape, lambda i: (0, 0))

    out = pl.pallas_call(
        _linblock_kernel,
        out_shape=jax.ShapeDtypeStruct((n_pad, outp), jnp.float32),
        grid=(n_pad // tn,),
        in_specs=[
            pl.BlockSpec((tn, in_size), lambda i: (i, 0)),   # x tile
            resident((in_size, l0p)), resident((1, l0p)),    # W1', b1'
            resident((l0p, l1p)),     resident((1, l1p)),    # W2', b2'
            resident((l1p, outp)),    resident((1, outp)),   # W3,  b3
        ],
        out_specs=pl.BlockSpec((tn, outp), lambda i: (i, 0)),
        compiler_params=pltpu.CompilerParams(
            dimension_semantics=("parallel",),
            vmem_limit_bytes=int(vmem_limit),
        ),
    )(xc, w1, b1, w2, b2, w3, b3)

    if n_pad > n or outp > out_size:
        out = out[:n, :out_size]         # skipped when already dense/aligned
    return out


_SINGLE_BUFFER_WEIGHTS = True            # flipped once if Buffered(1) rejected


def linblock_forward(x, prep):
    """Fused LinBlock eval-mode forward.

    x: (N, input_size) float32; prep: output of prepare_linblock_params().
    Returns (N, output_size) float32.
    """
    global _SINGLE_BUFFER_WEIGHTS
    n, in_size = x.shape
    w1, b1 = prep["w1"], prep["b1"]
    w2, b2 = prep["w2"], prep["b2"]
    w3, b3 = prep["w3"], prep["b3"]
    out_size = prep["out_size"]
    l0p, l1p, outp = w1.shape[1], w2.shape[1], w3.shape[1]

    weight_bytes = sum(int(w.size) * w.dtype.itemsize for w in (w1, w2, w3))
    bias_bytes = sum(int(b.size) * b.dtype.itemsize for b in (b1, b2, b3))
    tn, n_pad, vmem_limit = _plan_tiling(n, in_size, l0p, l1p, outp,
                                         weight_bytes, bias_bytes)

    kwargs = dict(tn=tn, n_pad=n_pad, out_size=out_size, vmem_limit=vmem_limit)
    args = (x, w1, b1, w2, b2, w3, b3)
    if _SINGLE_BUFFER_WEIGHTS:
        try:
            return _forward_impl(*args, single_buffer=True, **kwargs)
        except Exception:
            # pl.Buffered(1) not accepted by this jax build — fall back once.
            _SINGLE_BUFFER_WEIGHTS = False
    return _forward_impl(*args, single_buffer=False, **kwargs)


# --------------------------------------------------------------------------- #
# Synthetic params, reference, and self-test.                                 #
# --------------------------------------------------------------------------- #
def init_linblock_params(key, input_size, output_size, lin_size):
    """Deterministic synthetic init (PyTorch-like uniform for Linear layers)."""
    l0, l1 = lin_size
    keys = jax.random.split(key, 6)

    def lin_init(kw, kb, fan_in, fan_out):
        bound = 1.0 / jnp.sqrt(fan_in)
        w = jax.random.uniform(kw, (fan_in, fan_out), jnp.float32, -bound, bound)
        b = jax.random.uniform(kb, (1, fan_out), jnp.float32, -bound, bound)
        return w, b

    w1, b1 = lin_init(keys[0], keys[1], input_size, l0)
    w2, b2 = lin_init(keys[2], keys[3], l0, l1)
    w3, b3 = lin_init(keys[4], keys[5], l1, output_size)

    def bn_init(dim):
        return (jnp.ones((1, dim), jnp.float32),    # gamma
                jnp.zeros((1, dim), jnp.float32),   # beta
                jnp.zeros((1, dim), jnp.float32),   # running_mean
                jnp.ones((1, dim), jnp.float32))    # running_var

    g1, be1, m1, v1 = bn_init(l0)
    g2, be2, m2, v2 = bn_init(l1)

    return dict(w1=w1, b1=b1, g1=g1, be1=be1, m1=m1, v1=v1,
                w2=w2, b2=b2, g2=g2, be2=be2, m2=m2, v2=v2,
                w3=w3, b3=b3)


def _reference_forward(x, p):
    """Unfused f32 reference (explicit eval-mode BN) for correctness checking."""
    h = x @ p["w1"] + p["b1"]
    h = (h - p["m1"]) * jax.lax.rsqrt(p["v1"] + _BN_EPS) * p["g1"] + p["be1"]
    h = jnp.maximum(h, 0.0)
    h = h @ p["w2"] + p["b2"]
    h = (h - p["m2"]) * jax.lax.rsqrt(p["v2"] + _BN_EPS) * p["g2"] + p["be2"]
    h = jnp.maximum(h, 0.0)
    return h @ p["w3"] + p["b3"]


if __name__ == "__main__":
    # Small shapes consistent with LinBlock(input_size, output_size, lin_size, dropout)
    batch = 8
    input_size = 16
    lin_size = (32, 64)
    output_size = 8
    dropout = 0.1  # identity in eval-mode forward

    key = jax.random.PRNGKey(0)
    kx, kp = jax.random.split(key)
    x = jax.random.normal(kx, (batch, input_size), jnp.float32)
    params = init_linblock_params(kp, input_size, output_size, lin_size)

    prep = prepare_linblock_params(params)          # one-time fold/pad/cast
    out = linblock_forward(x, prep)
    out = jax.block_until_ready(out)

    ref = _reference_forward(x, params)
    assert out.shape == (batch, output_size)
    # bf16 MXU operands + BN folding -> loose tolerance vs the f32 reference.
    assert jnp.allclose(out, ref, atol=5e-2, rtol=5e-2)

    print("KERNEL_OK")
</pallas_src>

<mosaic_0001>
module attributes {stable_mosaic.version = 11 : i64} {
  func.func @_linblock_kernel(%arg0: i32, %arg1: memref<8x16xbf16, #tpu.memory_space<vmem>>, %arg2: memref<16x128xbf16, #tpu.memory_space<vmem>>, %arg3: memref<1x128xf32, #tpu.memory_space<vmem>>, %arg4: memref<128x128xbf16, #tpu.memory_space<vmem>>, %arg5: memref<1x128xf32, #tpu.memory_space<vmem>>, %arg6: memref<128x128xbf16, #tpu.memory_space<vmem>>, %arg7: memref<1x128xf32, #tpu.memory_space<vmem>>, %arg8: memref<8x128xf32, #tpu.memory_space<vmem>>) attributes {dimension_semantics = [#tpu.dimension_semantics<parallel>], iteration_bounds = array<i64: 1>, scalar_prefetch = 0 : i64, scratch_operands = 0 : i64, tpu.core_type = #tpu.core_type<tc>, window_params = [{transform_indices = @transform_0, window_bounds = array<i64: 8, 16>}, {pipeline_mode = #tpu.pipeline_mode<synchronous>, transform_indices = @transform_1, window_bounds = array<i64: 16, 128>}, {pipeline_mode = #tpu.pipeline_mode<synchronous>, transform_indices = @transform_2, window_bounds = array<i64: 1, 128>}, {pipeline_mode = #tpu.pipeline_mode<synchronous>, transform_indices = @transform_3, window_bounds = array<i64: 128, 128>}, {pipeline_mode = #tpu.pipeline_mode<synchronous>, transform_indices = @transform_4, window_bounds = array<i64: 1, 128>}, {pipeline_mode = #tpu.pipeline_mode<synchronous>, transform_indices = @transform_5, window_bounds = array<i64: 128, 128>}, {pipeline_mode = #tpu.pipeline_mode<synchronous>, transform_indices = @transform_6, window_bounds = array<i64: 1, 128>}, {transform_indices = @transform_7, window_bounds = array<i64: 8, 128>}]} {
    %c0 = arith.constant 0 : index
    %c0_0 = arith.constant 0 : index
    %0 = vector.load %arg1[%c0, %c0_0] : memref<8x16xbf16, #tpu.memory_space<vmem>>, vector<8x16xbf16>
    %c0_1 = arith.constant 0 : index
    %c0_2 = arith.constant 0 : index
    %1 = vector.load %arg2[%c0_1, %c0_2] : memref<16x128xbf16, #tpu.memory_space<vmem>>, vector<16x128xbf16>
    %cst = arith.constant dense<0.000000e+00> : vector<8x128xf32>
    %2 = tpu.matmul %0, %1, %cst {dimension_numbers = #tpu.dot_dimension_numbers<[1], [0], [0], [1], [0, 0, 1, 1], [], []>} : vector<8x16xbf16>, vector<16x128xbf16>, vector<8x128xf32> -> vector<8x128xf32>
    %c0_3 = arith.constant 0 : index
    %c0_4 = arith.constant 0 : index
    %3 = vector.load %arg3[%c0_3, %c0_4] : memref<1x128xf32, #tpu.memory_space<vmem>>, vector<1x128xf32>
    %4 = vector.broadcast %3 : vector<1x128xf32> to vector<8x128xf32>
    %5 = arith.addf %2, %4 : vector<8x128xf32>
    %cst_5 = arith.constant 0.000000e+00 : f32
    %6 = vector.broadcast %cst_5 : f32 to vector<8x128xf32>
    %7 = arith.maximumf %5, %6 : vector<8x128xf32>
    %8 = arith.truncf %7 : vector<8x128xf32> to vector<8x128xbf16>
    %c0_6 = arith.constant 0 : index
    %c0_7 = arith.constant 0 : index
    %9 = vector.load %arg4[%c0_6, %c0_7] : memref<128x128xbf16, #tpu.memory_space<vmem>>, vector<128x128xbf16>
    %cst_8 = arith.constant dense<0.000000e+00> : vector<8x128xf32>
    %10 = tpu.matmul %8, %9, %cst_8 {dimension_numbers = #tpu.dot_dimension_numbers<[1], [0], [0], [1], [0, 0, 1, 1], [], []>} : vector<8x128xbf16>, vector<128x128xbf16>, vector<8x128xf32> -> vector<8x128xf32>
    %c0_9 = arith.constant 0 : index
    %c0_10 = arith.constant 0 : index
    %11 = vector.load %arg5[%c0_9, %c0_10] : memref<1x128xf32, #tpu.memory_space<vmem>>, vector<1x128xf32>
    %12 = vector.broadcast %11 : vector<1x128xf32> to vector<8x128xf32>
    %13 = arith.addf %10, %12 : vector<8x128xf32>
    %cst_11 = arith.constant 0.000000e+00 : f32
    %14 = vector.broadcast %cst_11 : f32 to vector<8x128xf32>
    %15 = arith.maximumf %13, %14 : vector<8x128xf32>
    %16 = arith.truncf %15 : vector<8x128xf32> to vector<8x128xbf16>
    %c0_12 = arith.constant 0 : index
    %c0_13 = arith.constant 0 : index
    %17 = vector.load %arg6[%c0_12, %c0_13] : memref<128x128xbf16, #tpu.memory_space<vmem>>, vector<128x128xbf16>
    %cst_14 = arith.constant dense<0.000000e+00> : vector<8x128xf32>
    %18 = tpu.matmul %16, %17, %cst_14 {dimension_numbers = #tpu.dot_dimension_numbers<[1], [0], [0], [1], [0, 0, 1, 1], [], []>} : vector<8x128xbf16>, vector<128x128xbf16>, vector<8x128xf32> -> vector<8x128xf32>
    %c0_15 = arith.constant 0 : index
    %c0_16 = arith.constant 0 : index
    %19 = vector.load %arg7[%c0_15, %c0_16] : memref<1x128xf32, #tpu.memory_space<vmem>>, vector<1x128xf32>
    %20 = vector.broadcast %19 : vector<1x128xf32> to vector<8x128xf32>
    %21 = arith.addf %18, %20 : vector<8x128xf32>
    %c0_17 = arith.constant 0 : index
    %c0_18 = arith.constant 0 : index
    %22 = vector.load %arg8[%c0_17, %c0_18] : memref<8x128xf32, #tpu.memory_space<vmem>>, vector<8x128xf32>
    tpu.vector_store %arg8[%c0_17, %c0_18], %21 {strides = array<i32>} : memref<8x128xf32, #tpu.memory_space<vmem>>, vector<8x128xf32>,
    return
  }
  func.func @transform_0(%arg0: i32) -> (i32, i32) {
    %c0_i32 = arith.constant 0 : i32
    %c0_i32_0 = arith.constant 0 : i32
    return %arg0, %c0_i32 : i32, i32
  }
  func.func @transform_1(%arg0: i32) -> (i32, i32) {
    %c0_i32 = arith.constant 0 : i32
    %c0_i32_0 = arith.constant 0 : i32
    %c0_i32_1 = arith.constant 0 : i32
    return %c0_i32, %c0_i32_0 : i32, i32
  }
  func.func @transform_2(%arg0: i32) -> (i32, i32) {
    %c0_i32 = arith.constant 0 : i32
    %c0_i32_0 = arith.constant 0 : i32
    %c0_i32_1 = arith.constant 0 : i32
    return %c0_i32, %c0_i32_0 : i32, i32
  }
  func.func @transform_3(%arg0: i32) -> (i32, i32) {
    %c0_i32 = arith.constant 0 : i32
    %c0_i32_0 = arith.constant 0 : i32
    %c0_i32_1 = arith.constant 0 : i32
    return %c0_i32, %c0_i32_0 : i32, i32
  }
  func.func @transform_4(%arg0: i32) -> (i32, i32) {
    %c0_i32 = arith.constant 0 : i32
    %c0_i32_0 = arith.constant 0 : i32
    %c0_i32_1 = arith.constant 0 : i32
    return %c0_i32, %c0_i32_0 : i32, i32
  }
  func.func @transform_5(%arg0: i32) -> (i32, i32) {
    %c0_i32 = arith.constant 0 : i32
    %c0_i32_0 = arith.constant 0 : i32
    %c0_i32_1 = arith.constant 0 : i32
    return %c0_i32, %c0_i32_0 : i32, i32
  }
  func.func @transform_6(%arg0: i32) -> (i32, i32) {
    %c0_i32 = arith.constant 0 : i32
    %c0_i32_0 = arith.constant 0 : i32
    %c0_i32_1 = arith.constant 0 : i32
    return %c0_i32, %c0_i32_0 : i32, i32
  }
  func.func @transform_7(%arg0: i32) -> (i32, i32) {
    %c0_i32 = arith.constant 0 : i32
    %c0_i32_0 = arith.constant 0 : i32
    return %arg0, %c0_i32 : i32, i32
  }
}

module attributes {stable_mosaic.version = 11 : i64} {
  func.func @_linblock_kernel(%arg0: i32, %arg1: memref<8x16xbf16, #tpu.memory_space<vmem>>, %arg2: memref<16x128xbf16, #tpu.memory_space<vmem>>, %arg3: memref<1x128xf32, #tpu.memory_space<vmem>>, %arg4: memref<128x128xbf16, #tpu.memory_space<vmem>>, %arg5: memref<1x128xf32, #tpu.memory_space<vmem>>, %arg6: memref<128x128xbf16, #tpu.memory_space<vmem>>, %arg7: memref<1x128xf32, #tpu.memory_space<vmem>>, %arg8: memref<8x128xf32, #tpu.memory_space<vmem>>) attributes {dimension_semantics = [#tpu.dimension_semantics<parallel>], iteration_bounds = array<i64: 1>, scalar_prefetch = 0 : i64, scratch_operands = 0 : i64, tpu.core_type = #tpu.core_type<tc>, window_params = [{transform_indices = @transform_0, window_bounds = array<i64: 8, 16>}, {pipeline_mode = #tpu.pipeline_mode<synchronous>, transform_indices = @transform_1, window_bounds = array<i64: 16, 128>}, {pipeline_mode = #tpu.pipeline_mode<synchronous>, transform_indices = @transform_2, window_bounds = array<i64: 1, 128>}, {pipeline_mode = #tpu.pipeline_mode<synchronous>, transform_indices = @transform_3, window_bounds = array<i64: 128, 128>}, {pipeline_mode = #tpu.pipeline_mode<synchronous>, transform_indices = @transform_4, window_bounds = array<i64: 1, 128>}, {pipeline_mode = #tpu.pipeline_mode<synchronous>, transform_indices = @transform_5, window_bounds = array<i64: 128, 128>}, {pipeline_mode = #tpu.pipeline_mode<synchronous>, transform_indices = @transform_6, window_bounds = array<i64: 1, 128>}, {transform_indices = @transform_7, window_bounds = array<i64: 8, 128>}]} {
    %c0 = arith.constant 0 : index
    %c0_0 = arith.constant 0 : index
    %0 = vector.load %arg1[%c0, %c0_0] : memref<8x16xbf16, #tpu.memory_space<vmem>>, vector<8x16xbf16>
    %c0_1 = arith.constant 0 : index
    %c0_2 = arith.constant 0 : index
    %1 = vector.load %arg2[%c0_1, %c0_2] : memref<16x128xbf16, #tpu.memory_space<vmem>>, vector<16x128xbf16>
    %cst = arith.constant dense<0.000000e+00> : vector<8x128xf32>
    %2 = tpu.matmul %0, %1, %cst {dimension_numbers = #tpu.dot_dimension_numbers<[1], [0], [0], [1], [0, 0, 1, 1], [], []>} : vector<8x16xbf16>, vector<16x128xbf16>, vector<8x128xf32> -> vector<8x128xf32>
    %c0_3 = arith.constant 0 : index
    %c0_4 = arith.constant 0 : index
    %3 = vector.load %arg3[%c0_3, %c0_4] : memref<1x128xf32, #tpu.memory_space<vmem>>, vector<1x128xf32>
    %4 = vector.broadcast %3 : vector<1x128xf32> to vector<8x128xf32>
    %5 = arith.addf %2, %4 : vector<8x128xf32>
    %cst_5 = arith.constant 0.000000e+00 : f32
    %6 = vector.broadcast %cst_5 : f32 to vector<8x128xf32>
    %7 = arith.maximumf %5, %6 : vector<8x128xf32>
    %8 = arith.truncf %7 : vector<8x128xf32> to vector<8x128xbf16>
    %c0_6 = arith.constant 0 : index
    %c0_7 = arith.constant 0 : index
    %9 = vector.load %arg4[%c0_6, %c0_7] : memref<128x128xbf16, #tpu.memory_space<vmem>>, vector<128x128xbf16>
    %cst_8 = arith.constant dense<0.000000e+00> : vector<8x128xf32>
    %10 = tpu.matmul %8, %9, %cst_8 {dimension_numbers = #tpu.dot_dimension_numbers<[1], [0], [0], [1], [0, 0, 1, 1], [], []>} : vector<8x128xbf16>, vector<128x128xbf16>, vector<8x128xf32> -> vector<8x128xf32>
    %c0_9 = arith.constant 0 : index
    %c0_10 = arith.constant 0 : index
    %11 = vector.load %arg5[%c0_9, %c0_10] : memref<1x128xf32, #tpu.memory_space<vmem>>, vector<1x128xf32>
    %12 = vector.broadcast %11 : vector<1x128xf32> to vector<8x128xf32>
    %13 = arith.addf %10, %12 : vector<8x128xf32>
    %cst_11 = arith.constant 0.000000e+00 : f32
    %14 = vector.broadcast %cst_11 : f32 to vector<8x128xf32>
    %15 = arith.maximumf %13, %14 : vector<8x128xf32>
    %16 = arith.truncf %15 : vector<8x128xf32> to vector<8x128xbf16>
    %c0_12 = arith.constant 0 : index
    %c0_13 = arith.constant 0 : index
    %17 = vector.load %arg6[%c0_12, %c0_13] : memref<128x128xbf16, #tpu.memory_space<vmem>>, vector<128x128xbf16>
    %cst_14 = arith.constant dense<0.000000e+00> : vector<8x128xf32>
    %18 = tpu.matmul %16, %17, %cst_14 {dimension_numbers = #tpu.dot_dimension_numbers<[1], [0], [0], [1], [0, 0, 1, 1], [], []>} : vector<8x128xbf16>, vector<128x128xbf16>, vector<8x128xf32> -> vector<8x128xf32>
    %c0_15 = arith.constant 0 : index
    %c0_16 = arith.constant 0 : index
    %19 = vector.load %arg7[%c0_15, %c0_16] : memref<1x128xf32, #tpu.memory_space<vmem>>, vector<1x128xf32>
    %20 = vector.broadcast %19 : vector<1x128xf32> to vector<8x128xf32>
    %21 = arith.addf %18, %20 : vector<8x128xf32>
    %c0_17 = arith.constant 0 : index
    %c0_18 = arith.constant 0 : index
    %22 = vector.load %arg8[%c0_17, %c0_18] : memref<8x128xf32, #tpu.memory_space<vmem>>, vector<8x128xf32>
    tpu.vector_store %arg8[%c0_17, %c0_18], %21 {strides = array<i32>} : memref<8x128xf32, #tpu.memory_space<vmem>>, vector<8x128xf32>,
    return
  }
  func.func @transform_0(%arg0: i32) -> (i32, i32) {
    %c0_i32 = arith.constant 0 : i32
    %c0_i32_0 = arith.constant 0 : i32
    return %arg0, %c0_i32 : i32, i32
  }
  func.func @transform_1(%arg0: i32) -> (i32, i32) {
    %c0_i32 = arith.constant 0 : i32
    %c0_i32_0 = arith.constant 0 : i32
    %c0_i32_1 = arith.constant 0 : i32
    return %c0_i32, %c0_i32_0 : i32, i32
  }
  func.func @transform_2(%arg0: i32) -> (i32, i32) {
    %c0_i32 = arith.constant 0 : i32
    %c0_i32_0 = arith.constant 0 : i32
    %c0_i32_1 = arith.constant 0 : i32
    return %c0_i32, %c0_i32_0 : i32, i32
  }
  func.func @transform_3(%arg0: i32) -> (i32, i32) {
    %c0_i32 = arith.constant 0 : i32
    %c0_i32_0 = arith.constant 0 : i32
    %c0_i32_1 = arith.constant 0 : i32
    return %c0_i32, %c0_i32_0 : i32, i32
  }
  func.func @transform_4(%arg0: i32) -> (i32, i32) {
    %c0_i32 = arith.constant 0 : i32
    %c0_i32_0 = arith.constant 0 : i32
    %c0_i32_1 = arith.constant 0 : i32
    return %c0_i32, %c0_i32_0 : i32, i32
  }
  func.func @transform_5(%arg0: i32) -> (i32, i32) {
    %c0_i32 = arith.constant 0 : i32
    %c0_i32_0 = arith.constant 0 : i32
    %c0_i32_1 = arith.constant 0 : i32
    return %c0_i32, %c0_i32_0 : i32, i32
  }
  func.func @transform_6(%arg0: i32) -> (i32, i32) {
    %c0_i32 = arith.constant 0 : i32
    %c0_i32_0 = arith.constant 0 : i32
    %c0_i32_1 = arith.constant 0 : i32
    return %c0_i32, %c0_i32_0 : i32, i32
  }
  func.func @transform_7(%arg0: i32) -> (i32, i32) {
    %c0_i32 = arith.constant 0 : i32
    %c0_i32_0 = arith.constant 0 : i32
    return %arg0, %c0_i32 : i32, i32
  }
}

</mosaic_0001>

<llo_original>
// kernel: _forward_impl.1
$region0: #{_forward_impl.1}
  #allocation0 [shape = 'u32[]', space=smem, size = 0x4, offset = 0x4, fixed_abs, tag = 'smem constant byte address 0x4 - core index']
  #allocation1 [shape = 'u32[144,128]{1,0:T(1,128)}', space=vmem, size = 0x12000, scoped, tag = 'internal scratch']
  %s0 = inlined_call_operand.vmem [shape: bf16[8,16], index: 0, kind: input, shape index: {}]
  %s1 = inlined_call_operand.vmem [shape: bf16[16,128], index: 1, kind: input, shape index: {}]
  %s2 = inlined_call_operand.vmem [shape: f32[1,128], index: 2, kind: input, shape index: {}]
  %s3 = inlined_call_operand.hbm [shape: bf16[128,128], index: 3, kind: input, shape index: {}]
  %s4 = inlined_call_operand.vmem [shape: f32[1,128], index: 4, kind: input, shape index: {}]
  %s5 = inlined_call_operand.hbm [shape: bf16[128,128], index: 5, kind: input, shape index: {}]
  %s6 = inlined_call_operand.vmem [shape: f32[1,128], index: 6, kind: input, shape index: {}]
  %s7 = inlined_call_operand.hbm [shape: f32[8,128], index: 7, kind: output, shape index: {}]
  %s8 = sld [smem:[#allocation0]]
  $region46: #{_forward_impl.1} parent=0
    _
  %s10 = ssub.s32 1, %s8
  %s11 = scalar_select 0, %s10, %s8
  $region1: #{_forward_impl.1} parent=0
    #allocation2 [shape = 'u8[32768]{0}', space=vmem, size = 0x8000, scoped, tag = 'input window, operand 3, single buffered']
    #allocation3 [shape = 's32[1]{0}', space=sflag, size = 0x4, scoped, tag = 'scoped memory for _forward_impl.1']
    #allocation4 [shape = 's32[1]{0}', space=sflag, size = 0x4, scoped, tag = 'scoped memory for _forward_impl.1']
    #allocation5 [shape = 'u8[32768]{0}', space=vmem, size = 0x8000, scoped, tag = 'input window, operand 5, single buffered']
    #allocation6 [shape = 's32[1]{0}', space=sflag, size = 0x4, scoped, tag = 'scoped memory for _forward_impl.1']
    #allocation7 [shape = 'u8[4096]{0}', space=vmem, size = 0x1000, scoped, tag = 'output window, operand 0, single buffered']
    %12 = vsyncpa [#allocation3], 0
    %13 = vsyncpa [#allocation6], 0
    %14 = vsyncpa [#allocation4], 0
    // Predicated region
    $region2: #{_forward_impl.1} parent=1 // pred_check
      _
    $region3: #{_forward_impl.1} parent=1 // pred_check_branch
      %16 = sbr.rel (0) target = $region5
    $region4: #{_forward_impl.1} parent=1 // pred_region
      _
    $region5: #{_forward_impl.1} parent=1 // pred_fallthru
      _
    // Predicated region
    $region6: #{_forward_impl.1} parent=1 // pred_check
      _
    $region7: #{_forward_impl.1} parent=1 // pred_check_branch
      %18 = sbr.rel (0) target = $region9
    $region8: #{_forward_impl.1} parent=1 // pred_region
      _
    $region9: #{_forward_impl.1} parent=1 // pred_fallthru
      _
    // Predicated region
    $region10: #{_forward_impl.1} parent=1 // pred_check
      _
    $region11: #{_forward_impl.1} parent=1 // pred_check_branch
      %20 = sbr.rel (0) target = $region13
    $region12: #{_forward_impl.1} parent=1 // pred_region
      _
    $region13: #{_forward_impl.1} parent=1 // pred_fallthru
      _
    // Predicated region
    $region14: #{_forward_impl.1} parent=1 // pred_check
      _
    $region15: #{_forward_impl.1} parent=1 // pred_check_branch
      %22 = sbr.rel (0) target = $region17
    $region16: #{_forward_impl.1} parent=1 // pred_region
      %s24 = ssub.s32 1024, 1024
      %25 = vsyncadd [#allocation3], %s24
      %s26 = sshll.u32 [#allocation2], 4
      %s27 = int_to_ptr.vmem [resolvable:$true] %s26
      %32 = dma.hbm_to_vmem [thread:$0]  %s3, 1024, %s27, [#allocation3], 64, 64, 4
    $region17: #{_forward_impl.1} parent=1 // pred_fallthru
      _
    // Predicated region
    $region18: #{_forward_impl.1} parent=1 // pred_check
      _
    $region19: #{_forward_impl.1} parent=1 // pred_check_branch
      %34 = sbr.rel (0) target = $region21
    $region20: #{_forward_impl.1} parent=1 // pred_region
      _
    $region21: #{_forward_impl.1} parent=1 // pred_fallthru
      _
    // Predicated region
    $region22: #{_forward_impl.1} parent=1 // pred_check
      _
    $region23: #{_forward_impl.1} parent=1 // pred_check_branch
      %36 = sbr.rel (0) target = $region25
    $region24: #{_forward_impl.1} parent=1 // pred_region
      %s38 = ssub.s32 1024, 1024
      %39 = vsyncadd [#allocation6], %s38
      %s40 = sshll.u32 [#allocation5], 4
      %s41 = int_to_ptr.vmem [resolvable:$true] %s40
      %46 = dma.hbm_to_vmem [thread:$0]  %s5, 1024, %s41, [#allocation6], 64, 64, 4
    $region25: #{_forward_impl.1} parent=1 // pred_fallthru
      _
    // Predicated region
    $region26: #{_forward_impl.1} parent=1 // pred_check
      _
    $region27: #{_forward_impl.1} parent=1 // pred_check_branch
      %48 = sbr.rel (0) target = $region29
    $region28: #{_forward_impl.1} parent=1 // pred_region
      _
    $region29: #{_forward_impl.1} parent=1 // pred_fallthru
      _
    // Predicated region
    $region30: #{_forward_impl.1} parent=1 // pred_check
      _
    $region31: #{_forward_impl.1} parent=1 // pred_check_branch
      %50 = sbr.rel (0) target = $region33
    $region32: #{_forward_impl.1} parent=1 // pred_region
      %51 = dma.done [#allocation3], 1024
    $region33: #{_forward_impl.1} parent=1 // pred_fallthru
      _
    // Predicated region
    $region34: #{_forward_impl.1} parent=1 // pred_check
      _
    $region35: #{_forward_impl.1} parent=1 // pred_check_branch
      %53 = sbr.rel (0) target = $region37
    $region36: #{_forward_impl.1} parent=1 // pred_region
      %54 = dma.done [#allocation6], 1024
    $region37: #{_forward_impl.1} parent=1 // pred_fallthru
      _
    %v56 = vld [vmem:[%s0] sm:$0xf]
    %v57 = vld [vmem:[%s1] sm:$0xf]
    %v58 = vld [vmem:[%s1 + $0x4] sm:$0xf]
    %v59 = vld [vmem:[%s2] sm:$0x1]
    %v61 = vlaneseq
    %v62 = vshrl.u32 %v61, 7
    %v63 = vsub.s32 0, %v62
    %v64 = vrot.slane %v59, %v63
    %v68 = vunpack.c.l.b16 %v57
    %v69 = vunpack.c.l.b16 %v58
    %v70 = vpack.c.b16 %v69, %v68
    %vm72 = vcmask 130048
    %v74 = vsel %vm72, %v56, 0
    %76 = vmatprep.subr.bf16.mxu0 0
    %77 = vmatpush1.bf16.msra.mxu0 %v70
    %78 = vmatprep.subr.bf16.mxu0 0
    %79 = vmatpush1.bf16.msra.mxu0 0
    %80 = vmatprep.subr.bf16.mxu0 0
    %81 = vmatpush1.bf16.msra.mxu0 0
    %82 = vmatprep.subr.bf16.mxu0 0
    %83 = vmatpush1.bf16.msra.mxu0 0
    %84 = vmatprep.subr.bf16.mxu0 0
    %85 = vmatpush1.bf16.msra.mxu0 0
    %86 = vmatprep.subr.bf16.mxu0 0
    %87 = vmatpush1.bf16.msra.mxu0 0
    %88 = vmatprep.subr.bf16.mxu0 0
    %89 = vmatpush1.bf16.msra.mxu0 0
    %90 = vmatprep.subr.bf16.mxu0 0
    %91 = vmatpush1.bf16.msra.mxu0 0
    %92 = vmatprep.subr.bf16.mxu0 0
    %93 = vmatpush1.bf16.msra.mxu0 0
    %94 = vmatprep.subr.bf16.mxu0 0
    %95 = vmatpush1.bf16.msra.mxu0 0
    %96 = vmatprep.subr.bf16.mxu0 0
    %97 = vmatpush1.bf16.msra.mxu0 0
    %98 = vmatprep.subr.bf16.mxu0 0
    %99 = vmatpush1.bf16.msra.mxu0 0
    %100 = vmatprep.subr.bf16.mxu0 0
    %101 = vmatpush1.bf16.msra.mxu0 0
    %102 = vmatprep.subr.bf16.mxu0 0
    %103 = vmatpush1.bf16.msra.mxu0 0
    %104 = vmatprep.subr.bf16.mxu0 0
    %105 = vmatpush1.bf16.msra.mxu0 0
    %106 = vmatprep.subr.bf16.mxu0 0
    %107 = vmatpush1.bf16.msra.mxu0 0
    %108 = vmatprep.mubr.bf16.mxu0 0
    %109 = vmatmul.mubr.bf16.gmra.mrb[0].mxu0 %v74
    %v110 = vpop.f32.mrb[0].mxu0
    %v111 = vadd.f32 %v64, %v110
    %v112 = vpop.f32.mrb[0].mxu0
    %v113 = vpop.f32.mrb[0].mxu0
    %v114 = vpop.f32.mrb[0].mxu0
    %115 = vdwg.mxu0
    %v116 = vmax.f32 %v111, 0.0
    %v117 = vpack.c.bf16 %v116, %v116
    %v118 = vld [vmem:[#allocation2] sm:$0xf]
    %v119 = vld [vmem:[#allocation2 + $0x4] sm:$0xf]
    %v120 = vld [vmem:[#allocation2 + $0x8] sm:$0xf]
    %v121 = vld [vmem:[#allocation2 + $0xc] sm:$0xf]
    %v122 = vld [vmem:[#allocation2 + $0x10] sm:$0xf]
    %v123 = vld [vmem:[#allocation2 + $0x14] sm:$0xf]
    %v124 = vld [vmem:[#allocation2 + $0x18] sm:$0xf]
    %v125 = vld [vmem:[#allocation2 + $0x1c] sm:$0xf]
    %v126 = vld [vmem:[#allocation2 + $0x20] sm:$0xf]
    %v127 = vld [vmem:[#allocation2 + $0x24] sm:$0xf]
    %v128 = vld [vmem:[#allocation2 + $0x28] sm:$0xf]
    %v129 = vld [vmem:[#allocation2 + $0x2c] sm:$0xf]
    %v130 = vld [vmem:[#allocation2 + $0x30] sm:$0xf]
    %v131 = vld [vmem:[#allocation2 + $0x34] sm:$0xf]
    %v132 = vld [vmem:[#allocation2 + $0x38] sm:$0xf]
    %v133 = vld [vmem:[#allocation2 + $0x3c] sm:$0xf]
    %v134 = vld [vmem:[%s4] sm:$0x1]
    %v136 = vlaneseq
    %v137 = vshrl.u32 %v136, 7
    %v138 = vsub.s32 0, %v137
    %v139 = vrot.slane %v134, %v138
    %v157 = vunpack.c.l.b16 %v118
    %v158 = vunpack.c.l.b16 %v119
    %v159 = vunpack.c.l.b16 %v120
    %v160 = vunpack.c.l.b16 %v121
    %v161 = vunpack.c.l.b16 %v122
    %v162 = vunpack.c.l.b16 %v123
    %v163 = vunpack.c.l.b16 %v124
    %v164 = vunpack.c.l.b16 %v125
    %v165 = vunpack.c.l.b16 %v126
    %v166 = vunpack.c.l.b16 %v127
    %v167 = vunpack.c.l.b16 %v128
    %v168 = vunpack.c.l.b16 %v129
    %v169 = vunpack.c.l.b16 %v130
    %v170 = vunpack.c.l.b16 %v131
    %v171 = vunpack.c.l.b16 %v132
    %v172 = vunpack.c.l.b16 %v133
    %v173 = vpack.c.b16 %v158, %v157
    %v174 = vpack.c.b16 %v160, %v159
    %v175 = vpack.c.b16 %v162, %v161
    %v176 = vpack.c.b16 %v164, %v163
    %v177 = vpack.c.b16 %v166, %v165
    %v178 = vpack.c.b16 %v168, %v167
    %v179 = vpack.c.b16 %v170, %v169
    %v180 = vpack.c.b16 %v172, %v171
    %189 = vmatprep.subr.bf16.mxu0 0
    %190 = vmatpush1.bf16.msra.mxu0 %v173
    %191 = vmatprep.subr.bf16.mxu0 0
    %192 = vmatpush1.bf16.msra.mxu0 %v174
    %193 = vmatprep.subr.bf16.mxu0 0
    %194 = vmatpush1.bf16.msra.mxu0 %v175
    %195 = vmatprep.subr.bf16.mxu0 0
    %196 = vmatpush1.bf16.msra.mxu0 %v176
    %197 = vmatprep.subr.bf16.mxu0 0
    %198 = vmatpush1.bf16.msra.mxu0 %v177
    %199 = vmatprep.subr.bf16.mxu0 0
    %200 = vmatpush1.bf16.msra.mxu0 %v178
    %201 = vmatprep.subr.bf16.mxu0 0
    %202 = vmatpush1.bf16.msra.mxu0 %v179
    %203 = vmatprep.subr.bf16.mxu0 0
    %204 = vmatpush1.bf16.msra.mxu0 %v180
    %205 = vmatprep.subr.bf16.mxu0 0
    %206 = vmatpush1.bf16.msra.mxu0 0
    %207 = vmatprep.subr.bf16.mxu0 0
    %208 = vmatpush1.bf16.msra.mxu0 0
    %209 = vmatprep.subr.bf16.mxu0 0
    %210 = vmatpush1.bf16.msra.mxu0 0
    %211 = vmatprep.subr.bf16.mxu0 0
    %212 = vmatpush1.bf16.msra.mxu0 0
    %213 = vmatprep.subr.bf16.mxu0 0
    %214 = vmatpush1.bf16.msra.mxu0 0
    %215 = vmatprep.subr.bf16.mxu0 0
    %216 = vmatpush1.bf16.msra.mxu0 0
    %217 = vmatprep.subr.bf16.mxu0 0
    %218 = vmatpush1.bf16.msra.mxu0 0
    %219 = vmatprep.subr.bf16.mxu0 0
    %220 = vmatpush1.bf16.msra.mxu0 0
    %221 = vmatprep.mubr.bf16.mxu0 0
    %222 = vmatmul.mubr.bf16.gmra.mrb[0].mxu0 %v117
    %v223 = vpop.f32.mrb[0].mxu0
    %v224 = vadd.f32 %v139, %v223
    %v225 = vpop.f32.mrb[0].mxu0
    %v226 = vpop.f32.mrb[0].mxu0
    %v227 = vpop.f32.mrb[0].mxu0
    %228 = vdwg.mxu0
    %v229 = vmax.f32 %v224, 0.0
    %v230 = vpack.c.bf16 %v229, %v229
    %v231 = vld [vmem:[#allocation5] sm:$0xf]
    %v232 = vld [vmem:[#allocation5 + $0x4] sm:$0xf]
    %v233 = vld [vmem:[#allocation5 + $0x8] sm:$0xf]
    %v234 = vld [vmem:[#allocation5 + $0xc] sm:$0xf]
    %v235 = vld [vmem:[#allocation5 + $0x10] sm:$0xf]
    %v236 = vld [vmem:[#allocation5 + $0x14] sm:$0xf]
    %v237 = vld [vmem:[#allocation5 + $0x18] sm:$0xf]
    %v238 = vld [vmem:[#allocation5 + $0x1c] sm:$0xf]
    %v239 = vld [vmem:[#allocation5 + $0x20] sm:$0xf]
    %v240 = vld [vmem:[#allocation5 + $0x24] sm:$0xf]
    %v241 = vld [vmem:[#allocation5 + $0x28] sm:$0xf]
    %v242 = vld [vmem:[#allocation5 + $0x2c] sm:$0xf]
    %v243 = vld [vmem:[#allocation5 + $0x30] sm:$0xf]
    %v244 = vld [vmem:[#allocation5 + $0x34] sm:$0xf]
    %v245 = vld [vmem:[#allocation5 + $0x38] sm:$0xf]
    %v246 = vld [vmem:[#allocation5 + $0x3c] sm:$0xf]
    %v247 = vld [vmem:[%s6] sm:$0x1]
    %v249 = vlaneseq
    %v250 = vshrl.u32 %v249, 7
    %v251 = vsub.s32 0, %v250
    %v252 = vrot.slane %v247, %v251
    %v270 = vunpack.c.l.b16 %v231
    %v271 = vunpack.c.l.b16 %v232
    %v272 = vunpack.c.l.b16 %v233
    %v273 = vunpack.c.l.b16 %v234
    %v274 = vunpack.c.l.b16 %v235
    %v275 = vunpack.c.l.b16 %v236
    %v276 = vunpack.c.l.b16 %v237
    %v277 = vunpack.c.l.b16 %v238
    %v278 = vunpack.c.l.b16 %v239
    %v279 = vunpack.c.l.b16 %v240
    %v280 = vunpack.c.l.b16 %v241
    %v281 = vunpack.c.l.b16 %v242
    %v282 = vunpack.c.l.b16 %v243
    %v283 = vunpack.c.l.b16 %v244
    %v284 = vunpack.c.l.b16 %v245
    %v285 = vunpack.c.l.b16 %v246
    %v286 = vpack.c.b16 %v271, %v270
    %v287 = vpack.c.b16 %v273, %v272
    %v288 = vpack.c.b16 %v275, %v274
    %v289 = vpack.c.b16 %v277, %v276
    %v290 = vpack.c.b16 %v279, %v278
    %v291 = vpack.c.b16 %v281, %v280
    %v292 = vpack.c.b16 %v283, %v282
    %v293 = vpack.c.b16 %v285, %v284
    %302 = vmatprep.subr.bf16.mxu0 0
    %303 = vmatpush1.bf16.msra.mxu0 %v286
    %304 = vmatprep.subr.bf16.mxu0 0
    %305 = vmatpush1.bf16.msra.mxu0 %v287
    %306 = vmatprep.subr.bf16.mxu0 0
    %307 = vmatpush1.bf16.msra.mxu0 %v288
    %308 = vmatprep.subr.bf16.mxu0 0
    %309 = vmatpush1.bf16.msra.mxu0 %v289
    %310 = vmatprep.subr.bf16.mxu0 0
    %311 = vmatpush1.bf16.msra.mxu0 %v290
    %312 = vmatprep.subr.bf16.mxu0 0
    %313 = vmatpush1.bf16.msra.mxu0 %v291
    %314 = vmatprep.subr.bf16.mxu0 0
    %315 = vmatpush1.bf16.msra.mxu0 %v292
    %316 = vmatprep.subr.bf16.mxu0 0
    %317 = vmatpush1.bf16.msra.mxu0 %v293
    %318 = vmatprep.subr.bf16.mxu0 0
    %319 = vmatpush1.bf16.msra.mxu0 0
    %320 = vmatprep.subr.bf16.mxu0 0
    %321 = vmatpush1.bf16.msra.mxu0 0
    %322 = vmatprep.subr.bf16.mxu0 0
    %323 = vmatpush1.bf16.msra.mxu0 0
    %324 = vmatprep.subr.bf16.mxu0 0
    %325 = vmatpush1.bf16.msra.mxu0 0
    %326 = vmatprep.subr.bf16.mxu0 0
    %327 = vmatpush1.bf16.msra.mxu0 0
    %328 = vmatprep.subr.bf16.mxu0 0
    %329 = vmatpush1.bf16.msra.mxu0 0
    %330 = vmatprep.subr.bf16.mxu0 0
    %331 = vmatpush1.bf16.msra.mxu0 0
    %332 = vmatprep.subr.bf16.mxu0 0
    %333 = vmatpush1.bf16.msra.mxu0 0
    %334 = vmatprep.mubr.bf16.mxu0 0
    %335 = vmatmul.mubr.bf16.gmra.mrb[0].mxu0 %v230
    %v336 = vpop.f32.mrb[0].mxu0
    %v337 = vadd.f32 %v252, %v336
    %v338 = vpop.f32.mrb[0].mxu0
    %v339 = vpop.f32.mrb[0].mxu0
    %v340 = vpop.f32.mrb[0].mxu0
    %341 = vdwg.mxu0
    %342 = vst [vmem:[#allocation7] sm:$0xff] %v337
    // Predicated region
    $region38: #{_forward_impl.1} parent=1 // pred_check
      _
    $region39: #{_forward_impl.1} parent=1 // pred_check_branch
      %344 = sbr.rel (0) target = $region41
    $region40: #{_forward_impl.1} parent=1 // pred_region
      %s346 = ssub.s32 128, 128
      %347 = vsyncadd [#allocation4], %s346
      %s349 = sshll.u32 [#allocation7], 4
      %s350 = int_to_ptr.vmem [resolvable:$true] %s349
      %352 = dma.vmem_to_hbm [thread:$0]  %s350, 128, %s7, [#allocation4]
    $region41: #{_forward_impl.1} parent=1 // pred_fallthru
      _
    // Predicated region
    $region42: #{_forward_impl.1} parent=1 // pred_check
      _
    $region43: #{_forward_impl.1} parent=1 // pred_check_branch
      %354 = sbr.rel (0) target = $region45
    $region44: #{_forward_impl.1} parent=1 // pred_region
      %355 = dma.done [#allocation4], 128
    $region45: #{_forward_impl.1} parent=1 // pred_fallthru
      _
    %356 = vsyncpa [#allocation3], 1
    %357 = vsyncpa [#allocation6], 1
    %358 = vsyncpa [#allocation4], 1

// kernel: _forward_impl.1
$region0: #{_forward_impl.1}
  #allocation0 [shape = 'u32[]', space=smem, size = 0x4, offset = 0x4, fixed_abs, tag = 'smem constant byte address 0x4 - core index']
  #allocation1 [shape = 'u32[144,128]{1,0:T(1,128)}', space=vmem, size = 0x12000, scoped, tag = 'internal scratch']
  %s0 = inlined_call_operand.vmem [shape: bf16[8,16], index: 0, kind: input, shape index: {}]
  %s1 = inlined_call_operand.vmem [shape: bf16[16,128], index: 1, kind: input, shape index: {}]
  %s2 = inlined_call_operand.vmem [shape: f32[1,128], index: 2, kind: input, shape index: {}]
  %s3 = inlined_call_operand.hbm [shape: bf16[128,128], index: 3, kind: input, shape index: {}]
  %s4 = inlined_call_operand.vmem [shape: f32[1,128], index: 4, kind: input, shape index: {}]
  %s5 = inlined_call_operand.hbm [shape: bf16[128,128], index: 5, kind: input, shape index: {}]
  %s6 = inlined_call_operand.vmem [shape: f32[1,128], index: 6, kind: input, shape index: {}]
  %s7 = inlined_call_operand.hbm [shape: f32[8,128], index: 7, kind: output, shape index: {}]
  %s8 = sld [smem:[#allocation0]]
  $region46: #{_forward_impl.1} parent=0
    _
  %s10 = ssub.s32 1, %s8
  %s11 = scalar_select 0, %s10, %s8
  $region1: #{_forward_impl.1} parent=0
    #allocation2 [shape = 'u8[32768]{0}', space=vmem, size = 0x8000, scoped, tag = 'input window, operand 3, single buffered']
    #allocation3 [shape = 's32[1]{0}', space=sflag, size = 0x4, scoped, tag = 'scoped memory for _forward_impl.1']
    #allocation4 [shape = 's32[1]{0}', space=sflag, size = 0x4, scoped, tag = 'scoped memory for _forward_impl.1']
    #allocation5 [shape = 'u8[32768]{0}', space=vmem, size = 0x8000, scoped, tag = 'input window, operand 5, single buffered']
    #allocation6 [shape = 's32[1]{0}', space=sflag, size = 0x4, scoped, tag = 'scoped memory for _forward_impl.1']
    #allocation7 [shape = 'u8[4096]{0}', space=vmem, size = 0x1000, scoped, tag = 'output window, operand 0, single buffered']
    %12 = vsyncpa [#allocation3], 0
    %13 = vsyncpa [#allocation6], 0
    %14 = vsyncpa [#allocation4], 0
    // Predicated region
    $region2: #{_forward_impl.1} parent=1 // pred_check
      _
    $region3: #{_forward_impl.1} parent=1 // pred_check_branch
      %16 = sbr.rel (0) target = $region5
    $region4: #{_forward_impl.1} parent=1 // pred_region
      _
    $region5: #{_forward_impl.1} parent=1 // pred_fallthru
      _
    // Predicated region
    $region6: #{_forward_impl.1} parent=1 // pred_check
      _
    $region7: #{_forward_impl.1} parent=1 // pred_check_branch
      %18 = sbr.rel (0) target = $region9
    $region8: #{_forward_impl.1} parent=1 // pred_region
      _
    $region9: #{_forward_impl.1} parent=1 // pred_fallthru
      _
    // Predicated region
    $region10: #{_forward_impl.1} parent=1 // pred_check
      _
    $region11: #{_forward_impl.1} parent=1 // pred_check_branch
      %20 = sbr.rel (0) target = $region13
    $region12: #{_forward_impl.1} parent=1 // pred_region
      _
    $region13: #{_forward_impl.1} parent=1 // pred_fallthru
      _
    // Predicated region
    $region14: #{_forward_impl.1} parent=1 // pred_check
      _
    $region15: #{_forward_impl.1} parent=1 // pred_check_branch
      %22 = sbr.rel (0) target = $region17
    $region16: #{_forward_impl.1} parent=1 // pred_region
      %s24 = ssub.s32 1024, 1024
      %25 = vsyncadd [#allocation3], %s24
      %s26 = sshll.u32 [#allocation2], 4
      %s27 = int_to_ptr.vmem [resolvable:$true] %s26
      %32 = dma.hbm_to_vmem [thread:$0]  %s3, 1024, %s27, [#allocation3], 64, 64, 4
    $region17: #{_forward_impl.1} parent=1 // pred_fallthru
      _
    // Predicated region
    $region18: #{_forward_impl.1} parent=1 // pred_check
      _
    $region19: #{_forward_impl.1} parent=1 // pred_check_branch
      %34 = sbr.rel (0) target = $region21
    $region20: #{_forward_impl.1} parent=1 // pred_region
      _
    $region21: #{_forward_impl.1} parent=1 // pred_fallthru
      _
    // Predicated region
    $region22: #{_forward_impl.1} parent=1 // pred_check
      _
    $region23: #{_forward_impl.1} parent=1 // pred_check_branch
      %36 = sbr.rel (0) target = $region25
    $region24: #{_forward_impl.1} parent=1 // pred_region
      %s38 = ssub.s32 1024, 1024
      %39 = vsyncadd [#allocation6], %s38
      %s40 = sshll.u32 [#allocation5], 4
      %s41 = int_to_ptr.vmem [resolvable:$true] %s40
      %46 = dma.hbm_to_vmem [thread:$0]  %s5, 1024, %s41, [#allocation6], 64, 64, 4
    $region25: #{_forward_impl.1} parent=1 // pred_fallthru
      _
    // Predicated region
    $region26: #{_forward_impl.1} parent=1 // pred_check
      _
    $region27: #{_forward_impl.1} parent=1 // pred_check_branch
      %48 = sbr.rel (0) target = $region29
    $region28: #{_forward_impl.1} parent=1 // pred_region
      _
    $region29: #{_forward_impl.1} parent=1 // pred_fallthru
      _
    // Predicated region
    $region30: #{_forward_impl.1} parent=1 // pred_check
      _
    $region31: #{_forward_impl.1} parent=1 // pred_check_branch
      %50 = sbr.rel (0) target = $region33
    $region32: #{_forward_impl.1} parent=1 // pred_region
      %51 = dma.done [#allocation3], 1024
    $region33: #{_forward_impl.1} parent=1 // pred_fallthru
      _
    // Predicated region
    $region34: #{_forward_impl.1} parent=1 // pred_check
      _
    $region35: #{_forward_impl.1} parent=1 // pred_check_branch
      %53 = sbr.rel (0) target = $region37
    $region36: #{_forward_impl.1} parent=1 // pred_region
      %54 = dma.done [#allocation6], 1024
    $region37: #{_forward_impl.1} parent=1 // pred_fallthru
      _
    %v56 = vld [vmem:[%s0] sm:$0xf]
    %v57 = vld [vmem:[%s1] sm:$0xf]
    %v58 = vld [vmem:[%s1 + $0x4] sm:$0xf]
    %v59 = vld [vmem:[%s2] sm:$0x1]
    %v61 = vlaneseq
    %v62 = vshrl.u32 %v61, 7
    %v63 = vsub.s32 0, %v62
    %v64 = vrot.slane %v59, %v63
    %v68 = vunpack.c.l.b16 %v57
    %v69 = vunpack.c.l.b16 %v58
    %v70 = vpack.c.b16 %v69, %v68
    %vm72 = vcmask 130048
    %v74 = vsel %vm72, %v56, 0
    %76 = vmatprep.subr.bf16.mxu0 0
    %77 = vmatpush1.bf16.msra.mxu0 %v70
    %78 = vmatprep.subr.bf16.mxu0 0
    %79 = vmatpush1.bf16.msra.mxu0 0
    %80 = vmatprep.subr.bf16.mxu0 0
    %81 = vmatpush1.bf16.msra.mxu0 0
    %82 = vmatprep.subr.bf16.mxu0 0
    %83 = vmatpush1.bf16.msra.mxu0 0
    %84 = vmatprep.subr.bf16.mxu0 0
    %85 = vmatpush1.bf16.msra.mxu0 0
    %86 = vmatprep.subr.bf16.mxu0 0
    %87 = vmatpush1.bf16.msra.mxu0 0
    %88 = vmatprep.subr.bf16.mxu0 0
    %89 = vmatpush1.bf16.msra.mxu0 0
    %90 = vmatprep.subr.bf16.mxu0 0
    %91 = vmatpush1.bf16.msra.mxu0 0
    %92 = vmatprep.subr.bf16.mxu0 0
    %93 = vmatpush1.bf16.msra.mxu0 0
    %94 = vmatprep.subr.bf16.mxu0 0
    %95 = vmatpush1.bf16.msra.mxu0 0
    %96 = vmatprep.subr.bf16.mxu0 0
    %97 = vmatpush1.bf16.msra.mxu0 0
    %98 = vmatprep.subr.bf16.mxu0 0
    %99 = vmatpush1.bf16.msra.mxu0 0
    %100 = vmatprep.subr.bf16.mxu0 0
    %101 = vmatpush1.bf16.msra.mxu0 0
    %102 = vmatprep.subr.bf16.mxu0 0
    %103 = vmatpush1.bf16.msra.mxu0 0
    %104 = vmatprep.subr.bf16.mxu0 0
    %105 = vmatpush1.bf16.msra.mxu0 0
    %106 = vmatprep.subr.bf16.mxu0 0
    %107 = vmatpush1.bf16.msra.mxu0 0
    %108 = vmatprep.mubr.bf16.mxu0 0
    %109 = vmatmul.mubr.bf16.gmra.mrb[0].mxu0 %v74
    %v110 = vpop.f32.mrb[0].mxu0
    %v111 = vadd.f32 %v64, %v110
    %v112 = vpop.f32.mrb[0].mxu0
    %v113 = vpop.f32.mrb[0].mxu0
    %v114 = vpop.f32.mrb[0].mxu0
    %115 = vdwg.mxu0
    %v116 = vmax.f32 %v111, 0.0
    %v117 = vpack.c.bf16 %v116, %v116
    %v118 = vld [vmem:[#allocation2] sm:$0xf]
    %v119 = vld [vmem:[#allocation2 + $0x4] sm:$0xf]
    %v120 = vld [vmem:[#allocation2 + $0x8] sm:$0xf]
    %v121 = vld [vmem:[#allocation2 + $0xc] sm:$0xf]
    %v122 = vld [vmem:[#allocation2 + $0x10] sm:$0xf]
    %v123 = vld [vmem:[#allocation2 + $0x14] sm:$0xf]
    %v124 = vld [vmem:[#allocation2 + $0x18] sm:$0xf]
    %v125 = vld [vmem:[#allocation2 + $0x1c] sm:$0xf]
    %v126 = vld [vmem:[#allocation2 + $0x20] sm:$0xf]
    %v127 = vld [vmem:[#allocation2 + $0x24] sm:$0xf]
    %v128 = vld [vmem:[#allocation2 + $0x28] sm:$0xf]
    %v129 = vld [vmem:[#allocation2 + $0x2c] sm:$0xf]
    %v130 = vld [vmem:[#allocation2 + $0x30] sm:$0xf]
    %v131 = vld [vmem:[#allocation2 + $0x34] sm:$0xf]
    %v132 = vld [vmem:[#allocation2 + $0x38] sm:$0xf]
    %v133 = vld [vmem:[#allocation2 + $0x3c] sm:$0xf]
    %v134 = vld [vmem:[%s4] sm:$0x1]
    %v136 = vlaneseq
    %v137 = vshrl.u32 %v136, 7
    %v138 = vsub.s32 0, %v137
    %v139 = vrot.slane %v134, %v138
    %v157 = vunpack.c.l.b16 %v118
    %v158 = vunpack.c.l.b16 %v119
    %v159 = vunpack.c.l.b16 %v120
    %v160 = vunpack.c.l.b16 %v121
    %v161 = vunpack.c.l.b16 %v122
    %v162 = vunpack.c.l.b16 %v123
    %v163 = vunpack.c.l.b16 %v124
    %v164 = vunpack.c.l.b16 %v125
    %v165 = vunpack.c.l.b16 %v126
    %v166 = vunpack.c.l.b16 %v127
    %v167 = vunpack.c.l.b16 %v128
    %v168 = vunpack.c.l.b16 %v129
    %v169 = vunpack.c.l.b16 %v130
    %v170 = vunpack.c.l.b16 %v131
    %v171 = vunpack.c.l.b16 %v132
    %v172 = vunpack.c.l.b16 %v133
    %v173 = vpack.c.b16 %v158, %v157
    %v174 = vpack.c.b16 %v160, %v159
    %v175 = vpack.c.b16 %v162, %v161
    %v176 = vpack.c.b16 %v164, %v163
    %v177 = vpack.c.b16 %v166, %v165
    %v178 = vpack.c.b16 %v168, %v167
    %v179 = vpack.c.b16 %v170, %v169
    %v180 = vpack.c.b16 %v172, %v171
    %189 = vmatprep.subr.bf16.mxu0 0
    %190 = vmatpush1.bf16.msra.mxu0 %v173
    %191 = vmatprep.subr.bf16.mxu0 0
    %192 = vmatpush1.bf16.msra.mxu0 %v174
    %193 = vmatprep.subr.bf16.mxu0 0
    %194 = vmatpush1.bf16.msra.mxu0 %v175
    %195 = vmatprep.subr.bf16.mxu0 0
    %196 = vmatpush1.bf16.msra.mxu0 %v176
    %197 = vmatprep.subr.bf16.mxu0 0
    %198 = vmatpush1.bf16.msra.mxu0 %v177
    %199 = vmatprep.subr.bf16.mxu0 0
    %200 = vmatpush1.bf16.msra.mxu0 %v178
    %201 = vmatprep.subr.bf16.mxu0 0
    %202 = vmatpush1.bf16.msra.mxu0 %v179
    %203 = vmatprep.subr.bf16.mxu0 0
    %204 = vmatpush1.bf16.msra.mxu0 %v180
    %205 = vmatprep.subr.bf16.mxu0 0
    %206 = vmatpush1.bf16.msra.mxu0 0
    %207 = vmatprep.subr.bf16.mxu0 0
    %208 = vmatpush1.bf16.msra.mxu0 0
    %209 = vmatprep.subr.bf16.mxu0 0
    %210 = vmatpush1.bf16.msra.mxu0 0
    %211 = vmatprep.subr.bf16.mxu0 0
    %212 = vmatpush1.bf16.msra.mxu0 0
    %213 = vmatprep.subr.bf16.mxu0 0
    %214 = vmatpush1.bf16.msra.mxu0 0
    %215 = vmatprep.subr.bf16.mxu0 0
    %216 = vmatpush1.bf16.msra.mxu0 0
    %217 = vmatprep.subr.bf16.mxu0 0
    %218 = vmatpush1.bf16.msra.mxu0 0
    %219 = vmatprep.subr.bf16.mxu0 0
    %220 = vmatpush1.bf16.msra.mxu0 0
    %221 = vmatprep.mubr.bf16.mxu0 0
    %222 = vmatmul.mubr.bf16.gmra.mrb[0].mxu0 %v117
    %v223 = vpop.f32.mrb[0].mxu0
    %v224 = vadd.f32 %v139, %v223
    %v225 = vpop.f32.mrb[0].mxu0
    %v226 = vpop.f32.mrb[0].mxu0
    %v227 = vpop.f32.mrb[0].mxu0
    %228 = vdwg.mxu0
    %v229 = vmax.f32 %v224, 0.0
    %v230 = vpack.c.bf16 %v229, %v229
    %v231 = vld [vmem:[#allocation5] sm:$0xf]
    %v232 = vld [vmem:[#allocation5 + $0x4] sm:$0xf]
    %v233 = vld [vmem:[#allocation5 + $0x8] sm:$0xf]
    %v234 = vld [vmem:[#allocation5 + $0xc] sm:$0xf]
    %v235 = vld [vmem:[#allocation5 + $0x10] sm:$0xf]
    %v236 = vld [vmem:[#allocation5 + $0x14] sm:$0xf]
    %v237 = vld [vmem:[#allocation5 + $0x18] sm:$0xf]
    %v238 = vld [vmem:[#allocation5 + $0x1c] sm:$0xf]
    %v239 = vld [vmem:[#allocation5 + $0x20] sm:$0xf]
    %v240 = vld [vmem:[#allocation5 + $0x24] sm:$0xf]
    %v241 = vld [vmem:[#allocation5 + $0x28] sm:$0xf]
    %v242 = vld [vmem:[#allocation5 + $0x2c] sm:$0xf]
    %v243 = vld [vmem:[#allocation5 + $0x30] sm:$0xf]
    %v244 = vld [vmem:[#allocation5 + $0x34] sm:$0xf]
    %v245 = vld [vmem:[#allocation5 + $0x38] sm:$0xf]
    %v246 = vld [vmem:[#allocation5 + $0x3c] sm:$0xf]
    %v247 = vld [vmem:[%s6] sm:$0x1]
    %v249 = vlaneseq
    %v250 = vshrl.u32 %v249, 7
    %v251 = vsub.s32 0, %v250
    %v252 = vrot.slane %v247, %v251
    %v270 = vunpack.c.l.b16 %v231
    %v271 = vunpack.c.l.b16 %v232
    %v272 = vunpack.c.l.b16 %v233
    %v273 = vunpack.c.l.b16 %v234
    %v274 = vunpack.c.l.b16 %v235
    %v275 = vunpack.c.l.b16 %v236
    %v276 = vunpack.c.l.b16 %v237
    %v277 = vunpack.c.l.b16 %v238
    %v278 = vunpack.c.l.b16 %v239
    %v279 = vunpack.c.l.b16 %v240
    %v280 = vunpack.c.l.b16 %v241
    %v281 = vunpack.c.l.b16 %v242
    %v282 = vunpack.c.l.b16 %v243
    %v283 = vunpack.c.l.b16 %v244
    %v284 = vunpack.c.l.b16 %v245
    %v285 = vunpack.c.l.b16 %v246
    %v286 = vpack.c.b16 %v271, %v270
    %v287 = vpack.c.b16 %v273, %v272
    %v288 = vpack.c.b16 %v275, %v274
    %v289 = vpack.c.b16 %v277, %v276
    %v290 = vpack.c.b16 %v279, %v278
    %v291 = vpack.c.b16 %v281, %v280
    %v292 = vpack.c.b16 %v283, %v282
    %v293 = vpack.c.b16 %v285, %v284
    %302 = vmatprep.subr.bf16.mxu0 0
    %303 = vmatpush1.bf16.msra.mxu0 %v286
    %304 = vmatprep.subr.bf16.mxu0 0
    %305 = vmatpush1.bf16.msra.mxu0 %v287
    %306 = vmatprep.subr.bf16.mxu0 0
    %307 = vmatpush1.bf16.msra.mxu0 %v288
    %308 = vmatprep.subr.bf16.mxu0 0
    %309 = vmatpush1.bf16.msra.mxu0 %v289
    %310 = vmatprep.subr.bf16.mxu0 0
    %311 = vmatpush1.bf16.msra.mxu0 %v290
    %312 = vmatprep.subr.bf16.mxu0 0
    %313 = vmatpush1.bf16.msra.mxu0 %v291
    %314 = vmatprep.subr.bf16.mxu0 0
    %315 = vmatpush1.bf16.msra.mxu0 %v292
    %316 = vmatprep.subr.bf16.mxu0 0
    %317 = vmatpush1.bf16.msra.mxu0 %v293
    %318 = vmatprep.subr.bf16.mxu0 0
    %319 = vmatpush1.bf16.msra.mxu0 0
    %320 = vmatprep.subr.bf16.mxu0 0
    %321 = vmatpush1.bf16.msra.mxu0 0
    %322 = vmatprep.subr.bf16.mxu0 0
    %323 = vmatpush1.bf16.msra.mxu0 0
    %324 = vmatprep.subr.bf16.mxu0 0
    %325 = vmatpush1.bf16.msra.mxu0 0
    %326 = vmatprep.subr.bf16.mxu0 0
    %327 = vmatpush1.bf16.msra.mxu0 0
    %328 = vmatprep.subr.bf16.mxu0 0
    %329 = vmatpush1.bf16.msra.mxu0 0
    %330 = vmatprep.subr.bf16.mxu0 0
    %331 = vmatpush1.bf16.msra.mxu0 0
    %332 = vmatprep.subr.bf16.mxu0 0
    %333 = vmatpush1.bf16.msra.mxu0 0
    %334 = vmatprep.mubr.bf16.mxu0 0
    %335 = vmatmul.mubr.bf16.gmra.mrb[0].mxu0 %v230
    %v336 = vpop.f32.mrb[0].mxu0
    %v337 = vadd.f32 %v252, %v336
    %v338 = vpop.f32.mrb[0].mxu0
    %v339 = vpop.f32.mrb[0].mxu0
    %v340 = vpop.f32.mrb[0].mxu0
    %341 = vdwg.mxu0
    %342 = vst [vmem:[#allocation7] sm:$0xff] %v337
    // Predicated region
    $region38: #{_forward_impl.1} parent=1 // pred_check
      _
    $region39: #{_forward_impl.1} parent=1 // pred_check_branch
      %344 = sbr.rel (0) target = $region41
    $region40: #{_forward_impl.1} parent=1 // pred_region
      %s346 = ssub.s32 128, 128
      %347 = vsyncadd [#allocation4], %s346
      %s349 = sshll.u32 [#allocation7], 4
      %s350 = int_to_ptr.vmem [resolvable:$true] %s349
      %352 = dma.vmem_to_hbm [thread:$0]  %s350, 128, %s7, [#allocation4]
    $region41: #{_forward_impl.1} parent=1 // pred_fallthru
      _
    // Predicated region
    $region42: #{_forward_impl.1} parent=1 // pred_check
      _
    $region43: #{_forward_impl.1} parent=1 // pred_check_branch
      %354 = sbr.rel (0) target = $region45
    $region44: #{_forward_impl.1} parent=1 // pred_region
      %355 = dma.done [#allocation4], 128
    $region45: #{_forward_impl.1} parent=1 // pred_fallthru
      _
    %356 = vsyncpa [#allocation3], 1
    %357 = vsyncpa [#allocation6], 1
    %358 = vsyncpa [#allocation4], 1

</llo_original>
